<compile_context>
chip_gen: v5e
topology: v5e:2x2
jax: 0.10.0
libtpu: 0.0.40
codegen_flags: <defaults>
</compile_context>

<pallas_src>
import jax
import jax.numpy as jnp
from jax.experimental import pallas as pl
from jax.experimental.pallas import tpu as pltpu

NEG_SLOPE = 0.01  # PyTorch nn.LeakyReLU default


def _round_up(x, m):
    return ((x + m - 1) // m) * m


def _mlp_calw_kernel(x_ref, w12_ref, b12_ref, w3_ref, b3_ref, o_ref):
    # Fused Linear(C_in->H) o Linear(H->H):  h = x @ W12 + b12
    h = jnp.dot(x_ref[...], w12_ref[...], preferred_element_type=jnp.float32)
    h = h + b12_ref[...]

    # LeakyReLU (negative_slope = 0.01)
    h = jnp.where(h >= 0.0, h, NEG_SLOPE * h)

    # Linear(H -> C_out)
    z = jnp.dot(h, w3_ref[...], preferred_element_type=jnp.float32) + b3_ref[...]

    # Numerically stable softmax over the class axis (dim=1 of (-1, C_out) view).
    z = z - jnp.max(z, axis=-1, keepdims=True)
    e = jnp.exp(z)
    s = jnp.sum(e, axis=-1, keepdims=True)
    # Approx reciprocal runs on the EUP slot (co-issues for free); one Newton
    # step restores full f32 accuracy at the cost of two cheap VALU ops.
    inv = pl.reciprocal(s, approx=True)
    inv = inv * (2.0 - s * inv)
    o_ref[...] = (e * inv).astype(o_ref.dtype)


def mlp_calw_forward(x, params, *, tile_n=1024, vmem_limit_bytes=None):
    """x: (N, C_in) float32.  Returns softmax weights of shape (N, C_out).

    tile_n: rows per grid step.  Large tiles (512-2048) amortize the ~0.35 us
    per-grid-step overhead; weights are tiny, so the VMEM consumers are only
    the lane-padded x/out blocks and the hidden intermediate.  Pushing tile_n
    well past ~2048 may require raising vmem_limit_bytes (v5e: 16 MiB scoped
    default, v7x: 32 MiB scoped of 64 MiB physical).
    """
    w1, b1, w2, b2, w3, b3 = params
    n, c_in = x.shape
    hidden = w1.shape[1]
    c_out = w3.shape[1]

    # One-time algebraic fusion of the two consecutive Linear layers (there is
    # no activation between them in the module).
    w12 = jnp.dot(w1, w2, preferred_element_type=jnp.float32)
    b12 = jnp.dot(b1, w2, preferred_element_type=jnp.float32) + b2

    # Row-tile sizing: multiple of 8, clamped to the (padded) batch size.
    tile_n = max(8, min(int(tile_n), _round_up(n, 8)))
    tile_n -= tile_n % 8

    # Pad the batch so it divides evenly; padded rows are sliced off at the end.
    n_pad = _round_up(n, tile_n)
    if n_pad != n:
        x = jnp.pad(x, ((0, n_pad - n), (0, 0)))
    grid = (n_pad // tile_n,)

    out = pl.pallas_call(
        _mlp_calw_kernel,
        out_shape=jax.ShapeDtypeStruct((n_pad, c_out), x.dtype),
        grid_spec=pl.GridSpec(
            grid=grid,
            in_specs=[
                pl.BlockSpec((tile_n, c_in), lambda i: (i, 0)),    # x tile
                pl.BlockSpec((c_in, hidden), lambda i: (0, 0)),    # W12 (fused W1@W2)
                pl.BlockSpec((1, hidden), lambda i: (0, 0)),       # b12 (fused)
                pl.BlockSpec((hidden, c_out), lambda i: (0, 0)),   # W3
                pl.BlockSpec((1, c_out), lambda i: (0, 0)),        # b3
            ],
            out_specs=pl.BlockSpec((tile_n, c_out), lambda i: (i, 0)),
        ),
        compiler_params=pltpu.CompilerParams(
            dimension_semantics=("parallel",),
            vmem_limit_bytes=vmem_limit_bytes,
        ),
    )(x, w12, b12, w3, b3)
    return out[:n]


def init_params(key, in_channels, out_channels, hidden_dim):
    """Deterministic init mimicking PyTorch Linear default (uniform +/- 1/sqrt(fan_in)).
    Weights stored as (fan_in, fan_out)."""
    def linear(k, fan_in, fan_out):
        kw, kb = jax.random.split(k)
        bound = 1.0 / jnp.sqrt(fan_in)
        w = jax.random.uniform(kw, (fan_in, fan_out), jnp.float32, -bound, bound)
        b = jax.random.uniform(kb, (1, fan_out), jnp.float32, -bound, bound)
        return w, b

    k1, k2, k3 = jax.random.split(key, 3)
    w1, b1 = linear(k1, in_channels, hidden_dim)
    w2, b2 = linear(k2, hidden_dim, hidden_dim)
    w3, b3 = linear(k3, hidden_dim, out_channels)
    return (w1, b1, w2, b2, w3, b3)


def reference_forward(x, params):
    """Un-fused reference matching the PyTorch module layer-by-layer."""
    w1, b1, w2, b2, w3, b3 = params
    h = x @ w1 + b1
    h = h @ w2 + b2
    h = jnp.where(h >= 0.0, h, NEG_SLOPE * h)
    z = h @ w3 + b3
    z = z.reshape(-1, z.shape[1])  # out.view(-1, out.shape[1])
    return jax.nn.softmax(z, axis=1)


if __name__ == "__main__":
    key = jax.random.PRNGKey(0)
    kx, kp = jax.random.split(key)

    # Small shapes consistent with the module: batch of point predictions over
    # in_channels classes mapped to out_channels ensemble weights.  N=300 with
    # tile_n=128 exercises the tail-padding path and a grid of 3 steps.
    N, C_IN, C_OUT, HIDDEN = 300, 4, 4, 32
    x = jax.random.uniform(kx, (N, C_IN), jnp.float32)
    params = init_params(kp, C_IN, C_OUT, HIDDEN)

    out = mlp_calw_forward(x, params, tile_n=128)
    out = jax.block_until_ready(out)

    ref = reference_forward(x, params)
    assert out.shape == (N, C_OUT)
    assert jnp.allclose(out, ref, atol=1e-5, rtol=1e-5), "mismatch vs reference"
    assert jnp.allclose(jnp.sum(out, axis=1), 1.0, atol=1e-5), "softmax rows must sum to 1"

    print("KERNEL_OK")
</pallas_src>

<mosaic_0001>
module attributes {stable_mosaic.version = 11 : i64} {
  func.func @_mlp_calw_kernel(%arg0: i32, %arg1: memref<128x4xf32, #tpu.memory_space<vmem>>, %arg2: memref<4x32xf32, #tpu.memory_space<vmem>>, %arg3: memref<1x32xf32, #tpu.memory_space<vmem>>, %arg4: memref<32x4xf32, #tpu.memory_space<vmem>>, %arg5: memref<1x4xf32, #tpu.memory_space<vmem>>, %arg6: memref<128x4xf32, #tpu.memory_space<vmem>>) attributes {dimension_semantics = [#tpu.dimension_semantics<parallel>], iteration_bounds = array<i64: 3>, scalar_prefetch = 0 : i64, scratch_operands = 0 : i64, tpu.core_type = #tpu.core_type<tc>, window_params = [{transform_indices = @transform_0, window_bounds = array<i64: 128, 4>}, {pipeline_mode = #tpu.pipeline_mode<synchronous>, transform_indices = @transform_1, window_bounds = array<i64: 4, 32>}, {pipeline_mode = #tpu.pipeline_mode<synchronous>, transform_indices = @transform_2, window_bounds = array<i64: 1, 32>}, {pipeline_mode = #tpu.pipeline_mode<synchronous>, transform_indices = @transform_3, window_bounds = array<i64: 32, 4>}, {pipeline_mode = #tpu.pipeline_mode<synchronous>, transform_indices = @transform_4, window_bounds = array<i64: 1, 4>}, {transform_indices = @transform_5, window_bounds = array<i64: 128, 4>}]} {
    %c0 = arith.constant 0 : index
    %c0_0 = arith.constant 0 : index
    %0 = vector.load %arg1[%c0, %c0_0] : memref<128x4xf32, #tpu.memory_space<vmem>>, vector<128x4xf32>
    %c0_1 = arith.constant 0 : index
    %c0_2 = arith.constant 0 : index
    %1 = vector.load %arg2[%c0_1, %c0_2] : memref<4x32xf32, #tpu.memory_space<vmem>>, vector<4x32xf32>
    %cst = arith.constant dense<0.000000e+00> : vector<128x32xf32>
    %2 = tpu.matmul %0, %1, %cst {dimension_numbers = #tpu.dot_dimension_numbers<[1], [0], [0], [1], [0, 0, 1, 1], [], []>} : vector<128x4xf32>, vector<4x32xf32>, vector<128x32xf32> -> vector<128x32xf32>
    %c0_3 = arith.constant 0 : index
    %c0_4 = arith.constant 0 : index
    %3 = vector.load %arg3[%c0_3, %c0_4] : memref<1x32xf32, #tpu.memory_space<vmem>>, vector<1x32xf32>
    %4 = vector.broadcast %3 : vector<1x32xf32> to vector<128x32xf32>
    %5 = arith.addf %2, %4 : vector<128x32xf32>
    %cst_5 = arith.constant 0.000000e+00 : f32
    %6 = vector.broadcast %cst_5 : f32 to vector<128x32xf32>
    %7 = arith.cmpf oge, %5, %6 : vector<128x32xf32>
    %cst_6 = arith.constant 0.00999999977 : f32
    %8 = vector.broadcast %cst_6 : f32 to vector<128x32xf32>
    %9 = arith.mulf %8, %5 : vector<128x32xf32>
    %10 = arith.select %7, %5, %9 : vector<128x32xi1>, vector<128x32xf32>
    %c0_7 = arith.constant 0 : index
    %c0_8 = arith.constant 0 : index
    %11 = vector.load %arg4[%c0_7, %c0_8] : memref<32x4xf32, #tpu.memory_space<vmem>>, vector<32x4xf32>
    %cst_9 = arith.constant dense<0.000000e+00> : vector<128x4xf32>
    %12 = tpu.matmul %10, %11, %cst_9 {dimension_numbers = #tpu.dot_dimension_numbers<[1], [0], [0], [1], [0, 0, 1, 1], [], []>} : vector<128x32xf32>, vector<32x4xf32>, vector<128x4xf32> -> vector<128x4xf32>
    %c0_10 = arith.constant 0 : index
    %c0_11 = arith.constant 0 : index
    %13 = vector.load %arg5[%c0_10, %c0_11] : memref<1x4xf32, #tpu.memory_space<vmem>>, vector<1x4xf32>
    %14 = vector.broadcast %13 : vector<1x4xf32> to vector<128x4xf32>
    %15 = arith.addf %12, %14 : vector<128x4xf32>
    %cst_12 = arith.constant dense<0xFF800000> : vector<128xf32>
    %16 = vector.multi_reduction <maximumf>, %15, %cst_12 [1] : vector<128x4xf32> to vector<128xf32>
    %17 = vector.shape_cast %16 : vector<128xf32> to vector<128x1xf32>
    %18 = vector.broadcast %17 : vector<128x1xf32> to vector<128x4xf32>
    %19 = arith.subf %15, %18 : vector<128x4xf32>
    %20 = math.exp %19 : vector<128x4xf32>
    %cst_13 = arith.constant dense<0.000000e+00> : vector<128xf32>
    %21 = vector.multi_reduction <add>, %20, %cst_13 [1] : vector<128x4xf32> to vector<128xf32>
    %22 = vector.shape_cast %21 : vector<128xf32> to vector<128x1xf32>
    %23 = tpu.reciprocal %22 {approx = true} : vector<128x1xf32> -> vector<128x1xf32>
    %24 = arith.mulf %22, %23 : vector<128x1xf32>
    %cst_14 = arith.constant 2.000000e+00 : f32
    %25 = vector.broadcast %cst_14 : f32 to vector<128x1xf32>
    %26 = arith.subf %25, %24 : vector<128x1xf32>
    %27 = arith.mulf %23, %26 : vector<128x1xf32>
    %28 = vector.broadcast %27 : vector<128x1xf32> to vector<128x4xf32>
    %29 = arith.mulf %20, %28 : vector<128x4xf32>
    %c0_15 = arith.constant 0 : index
    %c0_16 = arith.constant 0 : index
    %30 = vector.load %arg6[%c0_15, %c0_16] : memref<128x4xf32, #tpu.memory_space<vmem>>, vector<128x4xf32>
    tpu.vector_store %arg6[%c0_15, %c0_16], %29 {strides = array<i32>} : memref<128x4xf32, #tpu.memory_space<vmem>>, vector<128x4xf32>,
    return
  }
  func.func @transform_0(%arg0: i32) -> (i32, i32) {
    %c0_i32 = arith.constant 0 : i32
    %c0_i32_0 = arith.constant 0 : i32
    return %arg0, %c0_i32 : i32, i32
  }
  func.func @transform_1(%arg0: i32) -> (i32, i32) {
    %c0_i32 = arith.constant 0 : i32
    %c0_i32_0 = arith.constant 0 : i32
    %c0_i32_1 = arith.constant 0 : i32
    return %c0_i32, %c0_i32_0 : i32, i32
  }
  func.func @transform_2(%arg0: i32) -> (i32, i32) {
    %c0_i32 = arith.constant 0 : i32
    %c0_i32_0 = arith.constant 0 : i32
    %c0_i32_1 = arith.constant 0 : i32
    return %c0_i32, %c0_i32_0 : i32, i32
  }
  func.func @transform_3(%arg0: i32) -> (i32, i32) {
    %c0_i32 = arith.constant 0 : i32
    %c0_i32_0 = arith.constant 0 : i32
    %c0_i32_1 = arith.constant 0 : i32
    return %c0_i32, %c0_i32_0 : i32, i32
  }
  func.func @transform_4(%arg0: i32) -> (i32, i32) {
    %c0_i32 = arith.constant 0 : i32
    %c0_i32_0 = arith.constant 0 : i32
    %c0_i32_1 = arith.constant 0 : i32
    return %c0_i32, %c0_i32_0 : i32, i32
  }
  func.func @transform_5(%arg0: i32) -> (i32, i32) {
    %c0_i32 = arith.constant 0 : i32
    %c0_i32_0 = arith.constant 0 : i32
    return %arg0, %c0_i32 : i32, i32
  }
}

</mosaic_0001>

<llo_original>
// kernel: tpu_custom_call.1
$region0: #{tpu_custom_call.1}
  #allocation0 [shape = 'u32[]', space=smem, size = 0x4, offset = 0x4, fixed_abs, tag = 'smem constant byte address 0x4 - core index']
  #allocation1 [shape = 'u32[72,128]{1,0:T(1,128)}', space=vmem, size = 0x9000, scoped, tag = 'internal scratch']
  %s0 = inlined_call_operand.vmem [shape: f32[384,4], index: 0, kind: input, shape index: {}]
  %s1 = inlined_call_operand.vmem [shape: f32[4,32], index: 1, kind: input, shape index: {}]
  %s2 = inlined_call_operand.vmem [shape: f32[1,32], index: 2, kind: input, shape index: {}]
  %s3 = inlined_call_operand.vmem [shape: f32[32,4], index: 3, kind: input, shape index: {}]
  %s4 = inlined_call_operand.vmem [shape: f32[1,4], index: 4, kind: input, shape index: {}]
  %s5 = inlined_call_operand.vmem [shape: f32[384,4], index: 5, kind: output, shape index: {}]
  %s6 = sld [smem:[#allocation0]]
  $region53: #{tpu_custom_call.1} parent=0
    _
  %s8 = ssub.s32 1, %s6
  %s9 = scalar_select 0, %s8, %s6
  loop: start=0, step=1, limit=5
  $region2: #{tpu_custom_call.1} parent=0 // loop_pre_header
    _
  $region3: #{tpu_custom_call.1} parent=0 // loop_header
    %s11 = sphi 0, %s15
    %p12 = scmp.ge.s32.totalorder %s11, 5
    %s21 = sphi 0, %s23
    %s24 = sphi 0, %s21
    %s25 = sphi 0, %s24
    %s41 = sphi 0, %s25
    %s45 = sphi 0, %s45
    %s47 = sphi 0, %s45
    %s48 = sphi 0, %s47
    %s62 = sphi 0, %s48
    %s66 = sphi 0, %s66
    %s68 = sphi 0, %s66
    %s69 = sphi 0, %s68
    %s83 = sphi 0, %s69
    %s87 = sphi 0, %s87
    %s89 = sphi 0, %s87
    %s90 = sphi 0, %s89
    %s104 = sphi 0, %s90
    %s108 = sphi 0, %s108
    %s110 = sphi 0, %s108
    %s111 = sphi 0, %s110
    %s125 = sphi 0, %s111
    %s131 = sphi 0, %s133
    %s134 = sphi 0, %s131
    %s135 = sphi 0, %s134
    %s151 = sphi 0, %s135
  $region4: #{tpu_custom_call.1} parent=0 // loop_header_branch
    %14 = sbr.rel (%p12) target = $region8
  $region5: #{tpu_custom_call.1} parent=0 // loop_body
    %s16 = ssub.s32 %s11, 1
    %s17 = ssub.s32 %s11, 2
    %s18 = sadd.s32 %s11, 1
    %s19 = ssub.s32 %s11, %s18
    %p20 = scmp.eq.s32.totalorder %s19, 0
    %s22 = sadd.s32 %s21, 1
    %s23 = scalar_select %p20, %s21, %s22
    %p26 = pneg %p20
    %p27 = scmp.eq.s32.totalorder %s11, 2
    %p28 = por %p26, %p27
    %p29 = scmp.ne.s32.totalorder %s21, %s24
    %p30 = scmp.eq.s32.totalorder %s11, 0
    %p31 = por %p29, %p30
    %p32 = scmp.ne.s32.totalorder %s21, %s24
    %p33 = scmp.eq.s32.totalorder %s16, 2
    %p34 = por %p32, %p33
    %p35 = scmp.ne.s32.totalorder %s24, %s25
    %p36 = scmp.eq.s32.totalorder %s16, 0
    %p37 = por %p35, %p36
    %p38 = scmp.ne.s32.totalorder %s24, %s25
    %p39 = scmp.eq.s32.totalorder %s17, 2
    %p40 = por %p38, %p39
    %p42 = scmp.ne.s32.totalorder %s25, %s41
    %p43 = scmp.eq.s32.totalorder %s17, 0
    %p44 = por %p42, %p43
    %s46 = sadd.s32 %s45, 1
    %p49 = scmp.eq.s32.totalorder %s11, 2
    %p50 = scmp.ne.s32.totalorder %s45, %s47
    %p51 = scmp.eq.s32.totalorder %s11, 0
    %p52 = por %p50, %p51
    %p53 = scmp.ne.s32.totalorder %s45, %s47
    %p54 = scmp.eq.s32.totalorder %s16, 2
    %p55 = por %p53, %p54
    %p56 = scmp.ne.s32.totalorder %s47, %s48
    %p57 = scmp.eq.s32.totalorder %s16, 0
    %p58 = por %p56, %p57
    %p59 = scmp.ne.s32.totalorder %s47, %s48
    %p60 = scmp.eq.s32.totalorder %s17, 2
    %p61 = por %p59, %p60
    %p63 = scmp.ne.s32.totalorder %s48, %s62
    %p64 = scmp.eq.s32.totalorder %s17, 0
    %p65 = por %p63, %p64
    %s67 = sadd.s32 %s66, 1
    %p70 = scmp.eq.s32.totalorder %s11, 2
    %p71 = scmp.ne.s32.totalorder %s66, %s68
    %p72 = scmp.eq.s32.totalorder %s11, 0
    %p73 = por %p71, %p72
    %p74 = scmp.ne.s32.totalorder %s66, %s68
    %p75 = scmp.eq.s32.totalorder %s16, 2
    %p76 = por %p74, %p75
    %p77 = scmp.ne.s32.totalorder %s68, %s69
    %p78 = scmp.eq.s32.totalorder %s16, 0
    %p79 = por %p77, %p78
    %p80 = scmp.ne.s32.totalorder %s68, %s69
    %p81 = scmp.eq.s32.totalorder %s17, 2
    %p82 = por %p80, %p81
    %p84 = scmp.ne.s32.totalorder %s69, %s83
    %p85 = scmp.eq.s32.totalorder %s17, 0
    %p86 = por %p84, %p85
    %s88 = sadd.s32 %s87, 1
    %p91 = scmp.eq.s32.totalorder %s11, 2
    %p92 = scmp.ne.s32.totalorder %s87, %s89
    %p93 = scmp.eq.s32.totalorder %s11, 0
    %p94 = por %p92, %p93
    %p95 = scmp.ne.s32.totalorder %s87, %s89
    %p96 = scmp.eq.s32.totalorder %s16, 2
    %p97 = por %p95, %p96
    %p98 = scmp.ne.s32.totalorder %s89, %s90
    %p99 = scmp.eq.s32.totalorder %s16, 0
    %p100 = por %p98, %p99
    %p101 = scmp.ne.s32.totalorder %s89, %s90
    %p102 = scmp.eq.s32.totalorder %s17, 2
    %p103 = por %p101, %p102
    %p105 = scmp.ne.s32.totalorder %s90, %s104
    %p106 = scmp.eq.s32.totalorder %s17, 0
    %p107 = por %p105, %p106
    %s109 = sadd.s32 %s108, 1
    %p112 = scmp.eq.s32.totalorder %s11, 2
    %p113 = scmp.ne.s32.totalorder %s108, %s110
    %p114 = scmp.eq.s32.totalorder %s11, 0
    %p115 = por %p113, %p114
    %p116 = scmp.ne.s32.totalorder %s108, %s110
    %p117 = scmp.eq.s32.totalorder %s16, 2
    %p118 = por %p116, %p117
    %p119 = scmp.ne.s32.totalorder %s110, %s111
    %p120 = scmp.eq.s32.totalorder %s16, 0
    %p121 = por %p119, %p120
    %p122 = scmp.ne.s32.totalorder %s110, %s111
    %p123 = scmp.eq.s32.totalorder %s17, 2
    %p124 = por %p122, %p123
    %p126 = scmp.ne.s32.totalorder %s111, %s125
    %p127 = scmp.eq.s32.totalorder %s17, 0
    %p128 = por %p126, %p127
    %s129 = ssub.s32 %s11, %s18
    %p130 = scmp.eq.s32.totalorder %s129, 0
    %s132 = sadd.s32 %s131, 1
    %s133 = scalar_select %p130, %s131, %s132
    %p136 = pneg %p130
    %p137 = scmp.eq.s32.totalorder %s11, 2
    %p138 = por %p136, %p137
    %p139 = scmp.ne.s32.totalorder %s131, %s134
    %p140 = scmp.eq.s32.totalorder %s11, 0
    %p141 = por %p139, %p140
    %p142 = scmp.ne.s32.totalorder %s131, %s134
    %p143 = scmp.eq.s32.totalorder %s16, 2
    %p144 = por %p142, %p143
    %p145 = scmp.ne.s32.totalorder %s134, %s135
    %p146 = scmp.eq.s32.totalorder %s16, 0
    %p147 = por %p145, %p146
    %p148 = scmp.ne.s32.totalorder %s134, %s135
    %p149 = scmp.eq.s32.totalorder %s17, 2
    %p150 = por %p148, %p149
    %p152 = scmp.ne.s32.totalorder %s135, %s151
    %p153 = scmp.eq.s32.totalorder %s17, 0
    %p154 = por %p152, %p153
    %p155 = scmp.le.s32.totalorder 1, %s11
    %p156 = scmp.lt.s32.totalorder %s11, 4
    %p157 = pnand %p155, %p156
    %p158 = pneg %p157
    // Predicated region
    $region9: #{tpu_custom_call.1} parent=5 // pred_check
      _
    $region10: #{tpu_custom_call.1} parent=5 // pred_check_branch
      %160 = sbr.rel (%p157) target = $region12
    $region11: #{tpu_custom_call.1} parent=5 // pred_region
      %s161 = ssub.s32 %s11, 1
      // Predicated region
      $region13: #{tpu_custom_call.1} parent=11 // pred_check
        %p162 = pneg %p58
      $region14: #{tpu_custom_call.1} parent=11 // pred_check_branch
        %164 = sbr.rel (%p162) target = $region16
      $region15: #{tpu_custom_call.1} parent=11 // pred_region
        _
      $region16: #{tpu_custom_call.1} parent=11 // pred_fallthru
        _
      // Predicated region
      $region17: #{tpu_custom_call.1} parent=11 // pred_check
        %p165 = pneg %p79
      $region18: #{tpu_custom_call.1} parent=11 // pred_check_branch
        %167 = sbr.rel (%p165) target = $region20
      $region19: #{tpu_custom_call.1} parent=11 // pred_region
        _
      $region20: #{tpu_custom_call.1} parent=11 // pred_fallthru
        _
      // Predicated region
      $region21: #{tpu_custom_call.1} parent=11 // pred_check
        %p168 = pneg %p100
      $region22: #{tpu_custom_call.1} parent=11 // pred_check_branch
        %170 = sbr.rel (%p168) target = $region24
      $region23: #{tpu_custom_call.1} parent=11 // pred_region
        _
      $region24: #{tpu_custom_call.1} parent=11 // pred_fallthru
        _
      // Predicated region
      $region25: #{tpu_custom_call.1} parent=11 // pred_check
        %p171 = pneg %p121
      $region26: #{tpu_custom_call.1} parent=11 // pred_check_branch
        %173 = sbr.rel (%p171) target = $region28
      $region27: #{tpu_custom_call.1} parent=11 // pred_region
        _
      $region28: #{tpu_custom_call.1} parent=11 // pred_fallthru
        _
    $region12: #{tpu_custom_call.1} parent=5 // pred_fallthru
      _
    %p174 = scmp.lt.s32.totalorder %s11, 3
    // Predicated region
    $region29: #{tpu_custom_call.1} parent=5 // pred_check
      %p175 = pneg %p174
    $region30: #{tpu_custom_call.1} parent=5 // pred_check_branch
      %177 = sbr.rel (%p175) target = $region32
    $region31: #{tpu_custom_call.1} parent=5 // pred_region
      // Predicated region
      $region33: #{tpu_custom_call.1} parent=31 // pred_check
        %p178 = pneg %p31
      $region34: #{tpu_custom_call.1} parent=31 // pred_check_branch
        %180 = sbr.rel (%p178) target = $region36
      $region35: #{tpu_custom_call.1} parent=31 // pred_region
        %s181 = smul.u32 16, %s11
        %p182 = scmp.lt.s32.totalorder %s181, 47
        %s183 = scalar_select %p182, %s181, 47
        %s184 = smul.addr %s183, 8
        %s185 = scalar_lea.vmem %s0, %s184
        %s186 = smul.u32 16, %s11
      $region36: #{tpu_custom_call.1} parent=31 // pred_fallthru
        _
    $region32: #{tpu_custom_call.1} parent=5 // pred_fallthru
      _
    %p187 = scmp.le.s32.totalorder 1, %s11
    %p188 = scmp.lt.s32.totalorder %s11, 4
    %p189 = pnand %p187, %p188
    %p190 = pneg %p189
    // Predicated region
    $region37: #{tpu_custom_call.1} parent=5 // pred_check
      _
    $region38: #{tpu_custom_call.1} parent=5 // pred_check_branch
      %192 = sbr.rel (%p189) target = $region40
    $region39: #{tpu_custom_call.1} parent=5 // pred_region
      %s193 = ssub.s32 %s11, 1
      %s194 = smul.u32 16, %s16
      %p195 = scmp.lt.s32.totalorder %s194, 47
      %s196 = scalar_select %p195, %s194, 47
      %s197 = smul.addr %s196, 8
      %s198 = scalar_lea.vmem %s0, %s197
      %p199 = pneg %p37
      %p200 = pneg %p34
      %p201 = pneg %p58
      %p202 = pneg %p55
      %p203 = pneg %p79
      %p204 = pneg %p76
      %p205 = pneg %p100
      %p206 = pneg %p97
      %p207 = pneg %p121
      %p208 = pneg %p118
      %p209 = pneg %p147
      %p210 = pneg %p144
      %s211 = smul.u32 16, %s16
      %p212 = scmp.lt.s32.totalorder %s211, 47
      %s213 = scalar_select %p212, %s211, 47
      %s214 = smul.addr %s213, 8
      %s215 = scalar_lea.vmem %s5, %s214
      %s216 = smul.u32 16, %s16
      %p217 = scmp.lt.s32.totalorder %s216, 47
      %s218 = scalar_select %p217, %s216, 47
      %s219 = smul.addr %s218, 8
      %s220 = scalar_lea.vmem %s0, %s219
      %s221 = smul.u32 16, %s16
      %s222 = smul.u32 16, %s16
      %p223 = scmp.lt.s32.totalorder %s222, 47
      %s224 = scalar_select %p223, %s222, 47
      %s225 = smul.addr %s224, 8
      %s226 = scalar_lea.vmem %s5, %s225
      %s227 = smul.u32 16, %s16
      %v228 = vld [vmem:[%s220] sm:$0xff]
      %v229 = vld [vmem:[%s220 + $0x8] sm:$0xff]
      %v230 = vld [vmem:[%s220 + $0x10] sm:$0xff]
      %v231 = vld [vmem:[%s220 + $0x18] sm:$0xff]
      %v232 = vld [vmem:[%s220 + $0x20] sm:$0xff]
      %v233 = vld [vmem:[%s220 + $0x28] sm:$0xff]
      %v234 = vld [vmem:[%s220 + $0x30] sm:$0xff]
      %v235 = vld [vmem:[%s220 + $0x38] sm:$0xff]
      %v236 = vld [vmem:[%s220 + $0x40] sm:$0xff]
      %v237 = vld [vmem:[%s220 + $0x48] sm:$0xff]
      %v238 = vld [vmem:[%s220 + $0x50] sm:$0xff]
      %v239 = vld [vmem:[%s220 + $0x58] sm:$0xff]
      %v240 = vld [vmem:[%s220 + $0x60] sm:$0xff]
      %v241 = vld [vmem:[%s220 + $0x68] sm:$0xff]
      %v242 = vld [vmem:[%s220 + $0x70] sm:$0xff]
      %v243 = vld [vmem:[%s220 + $0x78] sm:$0xff]
      %v244 = vld [vmem:[%s1] sm:$0xf]
      %v245 = vld [vmem:[%s2] sm:$0x1]
      %v247 = vperm.slane %v245, 0
      %vm249 = vcmask 31744
      %v251 = vsel %vm249, %v228, 0
      %v254 = vsel %vm249, %v229, 0
      %v257 = vsel %vm249, %v230, 0
      %v260 = vsel %vm249, %v231, 0
      %v263 = vsel %vm249, %v232, 0
      %v266 = vsel %vm249, %v233, 0
      %v269 = vsel %vm249, %v234, 0
      %v272 = vsel %vm249, %v235, 0
      %v275 = vsel %vm249, %v236, 0
      %v278 = vsel %vm249, %v237, 0
      %v281 = vsel %vm249, %v238, 0
      %v284 = vsel %vm249, %v239, 0
      %v287 = vsel %vm249, %v240, 0
      %v290 = vsel %vm249, %v241, 0
      %v293 = vsel %vm249, %v242, 0
      %v296 = vsel %vm249, %v243, 0
      %vm298 = vcmask 1043456
      %v300 = vsel %vm298, %v244, 0
      %302 = vmatpush.msra.mxu0 0.0
      %303 = vmatpush.msra.mxu0 0.0
      %304 = vmatpush.msra.mxu0 0.0
      %305 = vmatpush.msra.mxu0 0.0
      %306 = vmatpush.msra.mxu0 0.0
      %307 = vmatpush.msra.mxu0 0.0
      %308 = vmatpush.msra.mxu0 0.0
      %309 = vmatpush.msra.mxu0 0.0
      %310 = vmatpush.msra.mxu0 0.0
      %311 = vmatpush.msra.mxu0 0.0
      %312 = vmatpush.msra.mxu0 0.0
      %313 = vmatpush.msra.mxu0 0.0
      %314 = vmatpush.msra.mxu0 0.0
      %315 = vmatpush.msra.mxu0 0.0
      %316 = vmatpush.msra.mxu0 0.0
      %317 = vmatpush.msra.mxu0 %v300
      %318 = vmatmul.f32.gmra.mxu0 %v251
      %v319 = vpop.f32.mrf.mxu0
      %v320 = vadd.f32 %v247, %v319
      %321 = vmatmul.f32.gmra.mxu0 %v254
      %v322 = vpop.f32.mrf.mxu0
      %v323 = vadd.f32 %v247, %v322
      %324 = vmatmul.f32.gmra.mxu0 %v257
      %v325 = vpop.f32.mrf.mxu0
      %v326 = vadd.f32 %v247, %v325
      %327 = vmatmul.f32.gmra.mxu0 %v260
      %v328 = vpop.f32.mrf.mxu0
      %v329 = vadd.f32 %v247, %v328
      %330 = vmatmul.f32.gmra.mxu0 %v263
      %v331 = vpop.f32.mrf.mxu0
      %v332 = vadd.f32 %v247, %v331
      %333 = vmatmul.f32.gmra.mxu0 %v266
      %v334 = vpop.f32.mrf.mxu0
      %v335 = vadd.f32 %v247, %v334
      %336 = vmatmul.f32.gmra.mxu0 %v269
      %v337 = vpop.f32.mrf.mxu0
      %v338 = vadd.f32 %v247, %v337
      %339 = vmatmul.f32.gmra.mxu0 %v272
      %v340 = vpop.f32.mrf.mxu0
      %v341 = vadd.f32 %v247, %v340
      %342 = vmatmul.f32.gmra.mxu0 %v275
      %v343 = vpop.f32.mrf.mxu0
      %v344 = vadd.f32 %v247, %v343
      %345 = vmatmul.f32.gmra.mxu0 %v278
      %v346 = vpop.f32.mrf.mxu0
      %v347 = vadd.f32 %v247, %v346
      %348 = vmatmul.f32.gmra.mxu0 %v281
      %v349 = vpop.f32.mrf.mxu0
      %v350 = vadd.f32 %v247, %v349
      %351 = vmatmul.f32.gmra.mxu0 %v284
      %v352 = vpop.f32.mrf.mxu0
      %v353 = vadd.f32 %v247, %v352
      %354 = vmatmul.f32.gmra.mxu0 %v287
      %v355 = vpop.f32.mrf.mxu0
      %v356 = vadd.f32 %v247, %v355
      %357 = vmatmul.f32.gmra.mxu0 %v290
      %v358 = vpop.f32.mrf.mxu0
      %v359 = vadd.f32 %v247, %v358
      %360 = vmatmul.f32.gmra.mxu0 %v293
      %v361 = vpop.f32.mrf.mxu0
      %v362 = vadd.f32 %v247, %v361
      %363 = vmatmul.f32.gmra.mxu0 %v296
      %v364 = vpop.f32.mrf.mxu0
      %v365 = vadd.f32 %v247, %v364
      %366 = vdwg.mxu0
      %vm367 = vcmp.ge.f32.partialorder %v320, 0.0
      %vm368 = vcmp.ge.f32.partialorder %v323, 0.0
      %vm369 = vcmp.ge.f32.partialorder %v326, 0.0
      %vm370 = vcmp.ge.f32.partialorder %v329, 0.0
      %vm371 = vcmp.ge.f32.partialorder %v332, 0.0
      %vm372 = vcmp.ge.f32.partialorder %v335, 0.0
      %vm373 = vcmp.ge.f32.partialorder %v338, 0.0
      %vm374 = vcmp.ge.f32.partialorder %v341, 0.0
      %vm375 = vcmp.ge.f32.partialorder %v344, 0.0
      %vm376 = vcmp.ge.f32.partialorder %v347, 0.0
      %vm377 = vcmp.ge.f32.partialorder %v350, 0.0
      %vm378 = vcmp.ge.f32.partialorder %v353, 0.0
      %vm379 = vcmp.ge.f32.partialorder %v356, 0.0
      %vm380 = vcmp.ge.f32.partialorder %v359, 0.0
      %vm381 = vcmp.ge.f32.partialorder %v362, 0.0
      %vm382 = vcmp.ge.f32.partialorder %v365, 0.0
      %v383 = vmul.f32 %v320, 0.01
      %v384 = vmul.f32 %v323, 0.01
      %v385 = vmul.f32 %v326, 0.01
      %v386 = vmul.f32 %v329, 0.01
      %v387 = vmul.f32 %v332, 0.01
      %v388 = vmul.f32 %v335, 0.01
      %v389 = vmul.f32 %v338, 0.01
      %v390 = vmul.f32 %v341, 0.01
      %v391 = vmul.f32 %v344, 0.01
      %v392 = vmul.f32 %v347, 0.01
      %v393 = vmul.f32 %v350, 0.01
      %v394 = vmul.f32 %v353, 0.01
      %v395 = vmul.f32 %v356, 0.01
      %v396 = vmul.f32 %v359, 0.01
      %v397 = vmul.f32 %v362, 0.01
      %v398 = vmul.f32 %v365, 0.01
      %v399 = vsel %vm367, %v320, %v383
      %v400 = vsel %vm368, %v323, %v384
      %v401 = vsel %vm369, %v326, %v385
      %v402 = vsel %vm370, %v329, %v386
      %v403 = vsel %vm371, %v332, %v387
      %v404 = vsel %vm372, %v335, %v388
      %v405 = vsel %vm373, %v338, %v389
      %v406 = vsel %vm374, %v341, %v390
      %v407 = vsel %vm375, %v344, %v391
      %v408 = vsel %vm376, %v347, %v392
      %v409 = vsel %vm377, %v350, %v393
      %v410 = vsel %vm378, %v353, %v394
      %v411 = vsel %vm379, %v356, %v395
      %v412 = vsel %vm380, %v359, %v396
      %v413 = vsel %vm381, %v362, %v397
      %v414 = vsel %vm382, %v365, %v398
      %v415 = vld [vmem:[%s3] sm:$0xff]
      %v416 = vld [vmem:[%s3 + $0x8] sm:$0xff]
      %v417 = vld [vmem:[%s3 + $0x10] sm:$0xff]
      %v418 = vld [vmem:[%s3 + $0x18] sm:$0xff]
      %v419 = vld [vmem:[%s4] sm:$0x1]
      %v421 = vperm.slane %v419, 0
      %vm423 = vcmask 261120
      %v425 = vsel %vm423, %v399, 0
      %v428 = vsel %vm423, %v400, 0
      %v431 = vsel %vm423, %v401, 0
      %v434 = vsel %vm423, %v402, 0
      %v437 = vsel %vm423, %v403, 0
      %v440 = vsel %vm423, %v404, 0
      %v443 = vsel %vm423, %v405, 0
      %v446 = vsel %vm423, %v406, 0
      %v449 = vsel %vm423, %v407, 0
      %v452 = vsel %vm423, %v408, 0
      %v455 = vsel %vm423, %v409, 0
      %v458 = vsel %vm423, %v410, 0
      %v461 = vsel %vm423, %v411, 0
      %v464 = vsel %vm423, %v412, 0
      %v467 = vsel %vm423, %v413, 0
      %v470 = vsel %vm423, %v414, 0
      %472 = vmatpush.msra.mxu0 0.0
      %473 = vmatpush.msra.mxu0 0.0
      %474 = vmatpush.msra.mxu0 0.0
      %475 = vmatpush.msra.mxu0 0.0
      %476 = vmatpush.msra.mxu0 0.0
      %477 = vmatpush.msra.mxu0 0.0
      %478 = vmatpush.msra.mxu0 0.0
      %479 = vmatpush.msra.mxu0 0.0
      %480 = vmatpush.msra.mxu0 0.0
      %481 = vmatpush.msra.mxu0 0.0
      %482 = vmatpush.msra.mxu0 0.0
      %483 = vmatpush.msra.mxu0 0.0
      %484 = vmatpush.msra.mxu0 %v418
      %485 = vmatpush.msra.mxu0 %v417
      %486 = vmatpush.msra.mxu0 %v416
      %487 = vmatpush.msra.mxu0 %v415
      %488 = vmatmul.f32.gmra.mxu0 %v425
      %v489 = vpop.f32.mrf.mxu0
      %v490 = vadd.f32 %v421, %v489
      %491 = vmatmul.f32.gmra.mxu0 %v428
      %v492 = vpop.f32.mrf.mxu0
      %v493 = vadd.f32 %v421, %v492
      %494 = vmatmul.f32.gmra.mxu0 %v431
      %v495 = vpop.f32.mrf.mxu0
      %v496 = vadd.f32 %v421, %v495
      %497 = vmatmul.f32.gmra.mxu0 %v434
      %v498 = vpop.f32.mrf.mxu0
      %v499 = vadd.f32 %v421, %v498
      %500 = vmatmul.f32.gmra.mxu0 %v437
      %v501 = vpop.f32.mrf.mxu0
      %v502 = vadd.f32 %v421, %v501
      %503 = vmatmul.f32.gmra.mxu0 %v440
      %v504 = vpop.f32.mrf.mxu0
      %v505 = vadd.f32 %v421, %v504
      %506 = vmatmul.f32.gmra.mxu0 %v443
      %v507 = vpop.f32.mrf.mxu0
      %v508 = vadd.f32 %v421, %v507
      %509 = vmatmul.f32.gmra.mxu0 %v446
      %v510 = vpop.f32.mrf.mxu0
      %v511 = vadd.f32 %v421, %v510
      %512 = vmatmul.f32.gmra.mxu0 %v449
      %v513 = vpop.f32.mrf.mxu0
      %v514 = vadd.f32 %v421, %v513
      %515 = vmatmul.f32.gmra.mxu0 %v452
      %v516 = vpop.f32.mrf.mxu0
      %v517 = vadd.f32 %v421, %v516
      %518 = vmatmul.f32.gmra.mxu0 %v455
      %v519 = vpop.f32.mrf.mxu0
      %v520 = vadd.f32 %v421, %v519
      %521 = vmatmul.f32.gmra.mxu0 %v458
      %v522 = vpop.f32.mrf.mxu0
      %v523 = vadd.f32 %v421, %v522
      %524 = vmatmul.f32.gmra.mxu0 %v461
      %v525 = vpop.f32.mrf.mxu0
      %v526 = vadd.f32 %v421, %v525
      %527 = vmatmul.f32.gmra.mxu0 %v464
      %v528 = vpop.f32.mrf.mxu0
      %v529 = vadd.f32 %v421, %v528
      %530 = vmatmul.f32.gmra.mxu0 %v467
      %v531 = vpop.f32.mrf.mxu0
      %v532 = vadd.f32 %v421, %v531
      %533 = vmatmul.f32.gmra.mxu0 %v470
      %v534 = vpop.f32.mrf.mxu0
      %v535 = vadd.f32 %v421, %v534
      %536 = vdwg.mxu0
      %v537 = vsel %vm249, %v490, -inf
      %538 = vmax.xlane.f32.xlu0 %v537
      %v539 = vpop.xlane.xlu0 %538
      %v540 = vsel %vm249, %v493, -inf
      %541 = vmax.xlane.f32.xlu0 %v540
      %v542 = vpop.xlane.xlu0 %541
      %v543 = vsel %vm249, %v496, -inf
      %544 = vmax.xlane.f32.xlu0 %v543
      %v545 = vpop.xlane.xlu0 %544
      %v546 = vsel %vm249, %v499, -inf
      %547 = vmax.xlane.f32.xlu0 %v546
      %v548 = vpop.xlane.xlu0 %547
      %v549 = vsel %vm249, %v502, -inf
      %550 = vmax.xlane.f32.xlu0 %v549
      %v551 = vpop.xlane.xlu0 %550
      %v552 = vsel %vm249, %v505, -inf
      %553 = vmax.xlane.f32.xlu0 %v552
      %v554 = vpop.xlane.xlu0 %553
      %v555 = vsel %vm249, %v508, -inf
      %556 = vmax.xlane.f32.xlu0 %v555
      %v557 = vpop.xlane.xlu0 %556
      %v558 = vsel %vm249, %v511, -inf
      %559 = vmax.xlane.f32.xlu0 %v558
      %v560 = vpop.xlane.xlu0 %559
      %v561 = vsel %vm249, %v514, -inf
      %562 = vmax.xlane.f32.xlu0 %v561
      %v563 = vpop.xlane.xlu0 %562
      %v564 = vsel %vm249, %v517, -inf
      %565 = vmax.xlane.f32.xlu0 %v564
      %v566 = vpop.xlane.xlu0 %565
      %v567 = vsel %vm249, %v520, -inf
      %568 = vmax.xlane.f32.xlu0 %v567
      %v569 = vpop.xlane.xlu0 %568
      %v570 = vsel %vm249, %v523, -inf
      %571 = vmax.xlane.f32.xlu0 %v570
      %v572 = vpop.xlane.xlu0 %571
      %v573 = vsel %vm249, %v526, -inf
      %574 = vmax.xlane.f32.xlu0 %v573
      %v575 = vpop.xlane.xlu0 %574
      %v576 = vsel %vm249, %v529, -inf
      %577 = vmax.xlane.f32.xlu0 %v576
      %v578 = vpop.xlane.xlu0 %577
      %v579 = vsel %vm249, %v532, -inf
      %580 = vmax.xlane.f32.xlu0 %v579
      %v581 = vpop.xlane.xlu0 %580
      %v582 = vsel %vm249, %v535, -inf
      %583 = vmax.xlane.f32.xlu0 %v582
      %v584 = vpop.xlane.xlu0 %583
      %v585 = vsub.f32 %v490, %v539
      %v586 = vsub.f32 %v493, %v542
      %v587 = vsub.f32 %v496, %v545
      %v588 = vsub.f32 %v499, %v548
      %v589 = vsub.f32 %v502, %v551
      %v590 = vsub.f32 %v505, %v554
      %v591 = vsub.f32 %v508, %v557
      %v592 = vsub.f32 %v511, %v560
      %v593 = vsub.f32 %v514, %v563
      %v594 = vsub.f32 %v517, %v566
      %v595 = vsub.f32 %v520, %v569
      %v596 = vsub.f32 %v523, %v572
      %v597 = vsub.f32 %v526, %v575
      %v598 = vsub.f32 %v529, %v578
      %v599 = vsub.f32 %v532, %v581
      %v600 = vsub.f32 %v535, %v584
      %v601 = vmul.f32 %v585, 1.442695
      %v602 = vpow.pop %v601
      %v603 = vmul.f32 %v586, 1.442695
      %v604 = vpow.pop %v603
      %v605 = vmul.f32 %v587, 1.442695
      %v606 = vpow.pop %v605
      %v607 = vmul.f32 %v588, 1.442695
      %v608 = vpow.pop %v607
      %v609 = vmul.f32 %v589, 1.442695
      %v610 = vpow.pop %v609
      %v611 = vmul.f32 %v590, 1.442695
      %v612 = vpow.pop %v611
      %v613 = vmul.f32 %v591, 1.442695
      %v614 = vpow.pop %v613
      %v615 = vmul.f32 %v592, 1.442695
      %v616 = vpow.pop %v615
      %v617 = vmul.f32 %v593, 1.442695
      %v618 = vpow.pop %v617
      %v619 = vmul.f32 %v594, 1.442695
      %v620 = vpow.pop %v619
      %v621 = vmul.f32 %v595, 1.442695
      %v622 = vpow.pop %v621
      %v623 = vmul.f32 %v596, 1.442695
      %v624 = vpow.pop %v623
      %v625 = vmul.f32 %v597, 1.442695
      %v626 = vpow.pop %v625
      %v627 = vmul.f32 %v598, 1.442695
      %v628 = vpow.pop %v627
      %v629 = vmul.f32 %v599, 1.442695
      %v630 = vpow.pop %v629
      %v631 = vmul.f32 %v600, 1.442695
      %v632 = vpow.pop %v631
      %v633 = vsel %vm249, %v602, 0.0
      %634 = vadd.xlane.f32.xlu0 %v633
      %v635 = vpop.xlane.xlu0 %634
      %v636 = vsel %vm249, %v604, 0.0
      %637 = vadd.xlane.f32.xlu0 %v636
      %v638 = vpop.xlane.xlu0 %637
      %v639 = vsel %vm249, %v606, 0.0
      %640 = vadd.xlane.f32.xlu0 %v639
      %v641 = vpop.xlane.xlu0 %640
      %v642 = vsel %vm249, %v608, 0.0
      %643 = vadd.xlane.f32.xlu0 %v642
      %v644 = vpop.xlane.xlu0 %643
      %v645 = vsel %vm249, %v610, 0.0
      %646 = vadd.xlane.f32.xlu0 %v645
      %v647 = vpop.xlane.xlu0 %646
      %v648 = vsel %vm249, %v612, 0.0
      %649 = vadd.xlane.f32.xlu0 %v648
      %v650 = vpop.xlane.xlu0 %649
      %v651 = vsel %vm249, %v614, 0.0
      %652 = vadd.xlane.f32.xlu0 %v651
      %v653 = vpop.xlane.xlu0 %652
      %v654 = vsel %vm249, %v616, 0.0
      %655 = vadd.xlane.f32.xlu0 %v654
      %v656 = vpop.xlane.xlu0 %655
      %v657 = vsel %vm249, %v618, 0.0
      %658 = vadd.xlane.f32.xlu0 %v657
      %v659 = vpop.xlane.xlu0 %658
      %v660 = vsel %vm249, %v620, 0.0
      %661 = vadd.xlane.f32.xlu0 %v660
      %v662 = vpop.xlane.xlu0 %661
      %v663 = vsel %vm249, %v622, 0.0
      %664 = vadd.xlane.f32.xlu0 %v663
      %v665 = vpop.xlane.xlu0 %664
      %v666 = vsel %vm249, %v624, 0.0
      %667 = vadd.xlane.f32.xlu0 %v666
      %v668 = vpop.xlane.xlu0 %667
      %v669 = vsel %vm249, %v626, 0.0
      %670 = vadd.xlane.f32.xlu0 %v669
      %v671 = vpop.xlane.xlu0 %670
      %v672 = vsel %vm249, %v628, 0.0
      %673 = vadd.xlane.f32.xlu0 %v672
      %v674 = vpop.xlane.xlu0 %673
      %v675 = vsel %vm249, %v630, 0.0
      %676 = vadd.xlane.f32.xlu0 %v675
      %v677 = vpop.xlane.xlu0 %676
      %v678 = vsel %vm249, %v632, 0.0
      %679 = vadd.xlane.f32.xlu0 %v678
      %v680 = vpop.xlane.xlu0 %679
      %v681 = vrcp.pop %v635
      %v682 = vrcp.pop %v638
      %v683 = vrcp.pop %v641
      %v684 = vrcp.pop %v644
      %v685 = vrcp.pop %v647
      %v686 = vrcp.pop %v650
      %v687 = vrcp.pop %v653
      %v688 = vrcp.pop %v656
      %v689 = vrcp.pop %v659
      %v690 = vrcp.pop %v662
      %v691 = vrcp.pop %v665
      %v692 = vrcp.pop %v668
      %v693 = vrcp.pop %v671
      %v694 = vrcp.pop %v674
      %v695 = vrcp.pop %v677
      %v696 = vrcp.pop %v680
      %v697 = vmul.f32 %v635, %v681
      %v698 = vmul.f32 %v638, %v682
      %v699 = vmul.f32 %v641, %v683
      %v700 = vmul.f32 %v644, %v684
      %v701 = vmul.f32 %v647, %v685
      %v702 = vmul.f32 %v650, %v686
      %v703 = vmul.f32 %v653, %v687
      %v704 = vmul.f32 %v656, %v688
      %v705 = vmul.f32 %v659, %v689
      %v706 = vmul.f32 %v662, %v690
      %v707 = vmul.f32 %v665, %v691
      %v708 = vmul.f32 %v668, %v692
      %v709 = vmul.f32 %v671, %v693
      %v710 = vmul.f32 %v674, %v694
      %v711 = vmul.f32 %v677, %v695
      %v712 = vmul.f32 %v680, %v696
      %v713 = vsub.f32 2.0, %v697
      %v714 = vsub.f32 2.0, %v698
      %v715 = vsub.f32 2.0, %v699
      %v716 = vsub.f32 2.0, %v700
      %v717 = vsub.f32 2.0, %v701
      %v718 = vsub.f32 2.0, %v702
      %v719 = vsub.f32 2.0, %v703
      %v720 = vsub.f32 2.0, %v704
      %v721 = vsub.f32 2.0, %v705
      %v722 = vsub.f32 2.0, %v706
      %v723 = vsub.f32 2.0, %v707
      %v724 = vsub.f32 2.0, %v708
      %v725 = vsub.f32 2.0, %v709
      %v726 = vsub.f32 2.0, %v710
      %v727 = vsub.f32 2.0, %v711
      %v728 = vsub.f32 2.0, %v712
      %v729 = vmul.f32 %v681, %v713
      %v730 = vmul.f32 %v682, %v714
      %v731 = vmul.f32 %v683, %v715
      %v732 = vmul.f32 %v684, %v716
      %v733 = vmul.f32 %v685, %v717
      %v734 = vmul.f32 %v686, %v718
      %v735 = vmul.f32 %v687, %v719
      %v736 = vmul.f32 %v688, %v720
      %v737 = vmul.f32 %v689, %v721
      %v738 = vmul.f32 %v690, %v722
      %v739 = vmul.f32 %v691, %v723
      %v740 = vmul.f32 %v692, %v724
      %v741 = vmul.f32 %v693, %v725
      %v742 = vmul.f32 %v694, %v726
      %v743 = vmul.f32 %v695, %v727
      %v744 = vmul.f32 %v696, %v728
      %v745 = vmul.f32 %v602, %v729
      %v746 = vmul.f32 %v604, %v730
      %v747 = vmul.f32 %v606, %v731
      %v748 = vmul.f32 %v608, %v732
      %v749 = vmul.f32 %v610, %v733
      %v750 = vmul.f32 %v612, %v734
      %v751 = vmul.f32 %v614, %v735
      %v752 = vmul.f32 %v616, %v736
      %v753 = vmul.f32 %v618, %v737
      %v754 = vmul.f32 %v620, %v738
      %v755 = vmul.f32 %v622, %v739
      %v756 = vmul.f32 %v624, %v740
      %v757 = vmul.f32 %v626, %v741
      %v758 = vmul.f32 %v628, %v742
      %v759 = vmul.f32 %v630, %v743
      %v760 = vmul.f32 %v632, %v744
      %761 = vst.msk [vmem:[%s226] sm:$0xff] %vm249, %v745
      %762 = vst.msk [vmem:[%s226 + $0x8] sm:$0xff] %vm249, %v746
      %763 = vst.msk [vmem:[%s226 + $0x10] sm:$0xff] %vm249, %v747
      %764 = vst.msk [vmem:[%s226 + $0x18] sm:$0xff] %vm249, %v748
      %765 = vst.msk [vmem:[%s226 + $0x20] sm:$0xff] %vm249, %v749
      %766 = vst.msk [vmem:[%s226 + $0x28] sm:$0xff] %vm249, %v750
      %767 = vst.msk [vmem:[%s226 + $0x30] sm:$0xff] %vm249, %v751
      %768 = vst.msk [vmem:[%s226 + $0x38] sm:$0xff] %vm249, %v752
      %769 = vst.msk [vmem:[%s226 + $0x40] sm:$0xff] %vm249, %v753
      %770 = vst.msk [vmem:[%s226 + $0x48] sm:$0xff] %vm249, %v754
      %771 = vst.msk [vmem:[%s226 + $0x50] sm:$0xff] %vm249, %v755
      %772 = vst.msk [vmem:[%s226 + $0x58] sm:$0xff] %vm249, %v756
      %773 = vst.msk [vmem:[%s226 + $0x60] sm:$0xff] %vm249, %v757
      %774 = vst.msk [vmem:[%s226 + $0x68] sm:$0xff] %vm249, %v758
      %775 = vst.msk [vmem:[%s226 + $0x70] sm:$0xff] %vm249, %v759
      %776 = vst.msk [vmem:[%s226 + $0x78] sm:$0xff] %vm249, %v760
      %s777 = smul.u32 16, %s16
      %p778 = scmp.lt.s32.totalorder %s777, 47
      %s779 = scalar_select %p778, %s777, 47
      %s780 = smul.addr %s779, 8
      %s781 = scalar_lea.vmem %s5, %s780
      // Predicated region
      $region41: #{tpu_custom_call.1} parent=39 // pred_check
        %p782 = pneg %p144
      $region42: #{tpu_custom_call.1} parent=39 // pred_check_branch
        %784 = sbr.rel (%p782) target = $region44
      $region43: #{tpu_custom_call.1} parent=39 // pred_region
        %s785 = smul.u32 16, %s16
      $region44: #{tpu_custom_call.1} parent=39 // pred_fallthru
        _
    $region40: #{tpu_custom_call.1} parent=5 // pred_fallthru
      _
    %p786 = scmp.le.s32.totalorder 2, %s11
    // Predicated region
    $region45: #{tpu_custom_call.1} parent=5 // pred_check
      %p787 = pneg %p786
    $region46: #{tpu_custom_call.1} parent=5 // pred_check_branch
      %789 = sbr.rel (%p787) target = $region48
    $region47: #{tpu_custom_call.1} parent=5 // pred_region
      %s790 = ssub.s32 %s11, 2
      // Predicated region
      $region49: #{tpu_custom_call.1} parent=47 // pred_check
        %p791 = pneg %p150
      $region50: #{tpu_custom_call.1} parent=47 // pred_check_branch
        %793 = sbr.rel (%p791) target = $region52
      $region51: #{tpu_custom_call.1} parent=47 // pred_region
        %s794 = smul.u32 16, %s17
        %p795 = scmp.lt.s32.totalorder %s794, 47
        %s796 = scalar_select %p795, %s794, 47
        %s797 = smul.addr %s796, 8
        %s798 = scalar_lea.vmem %s5, %s797
      $region52: #{tpu_custom_call.1} parent=47 // pred_fallthru
        _
    $region48: #{tpu_custom_call.1} parent=5 // pred_fallthru
      _
  $region6: #{tpu_custom_call.1} parent=0 // loop_footer
    %s15 = sadd.s32 1, %s11
  $region7: #{tpu_custom_call.1} parent=0 // loop_footer_branch
    %10 = sbr.rel target = $region3
  $region8: #{tpu_custom_call.1} parent=0 // loop_exit
    _

</llo_original>
